<compile_context>
chip_gen: v7x
topology: tpu7x:2x2x1
jax: 0.10.0
libtpu: 0.0.40
codegen_flags: <defaults>
</compile_context>

<pallas_src>
import jax
import jax.numpy as jnp
from jax.experimental import pallas as pl
from jax.experimental.pallas import tpu as pltpu

LANE = 128


# ----------------------------- Pallas kernel --------------------------------
def ann_kernel(x_ref, w1_ref, b1_ref, w2_ref, b2_ref, w3_ref, b3_ref, o_ref):
    # fused interp + fc[0]  (x @ (wi @ w1)) + b1, ReLU
    h1 = jnp.dot(x_ref[...], w1_ref[...],
                 preferred_element_type=jnp.float32) + b1_ref[...]
    h1 = jnp.maximum(h1, 0.0)
    # fc[2] (padded 64 -> 128 lanes) + ReLU
    h2 = jnp.dot(h1, w2_ref[...],
                 preferred_element_type=jnp.float32) + b2_ref[...]
    h2 = jnp.maximum(h2, 0.0)
    # fc[4] (classes padded to 128 lanes -> lane-dense store)
    o_ref[...] = jnp.dot(h2, w3_ref[...],
                         preferred_element_type=jnp.float32) + b3_ref[...]


def ann_forward_pallas(x, wi, w1, b1, w2, b2, w3, b3, *, batch_tile=128):
    """Forward pass. x: (batch, bands) f32.  Returns (batch, num_classes) f32."""
    batch, bands = x.shape
    num_classes = w3.shape[1]
    hidden2 = w2.shape[1]

    # (1) Fold the interpolation matmul into the first FC layer (exact: no
    #     nonlinearity between them).  Tiny host-side matmul per forward.
    w1f = (wi @ w1).astype(jnp.float32)                      # (bands, 128)

    # (2)/(3) Zero-pad hidden-64 and class dims to 128 lanes (exact: padded h2
    #     columns are ReLU(0)=0 and padded w3 rows/cols are zero).
    w2p = jnp.zeros((w2.shape[0], LANE), jnp.float32).at[:, :hidden2].set(w2)
    b2p = jnp.zeros((1, LANE), jnp.float32).at[:, :hidden2].set(b2)
    w3p = jnp.zeros((LANE, LANE), jnp.float32).at[:hidden2, :num_classes].set(w3)
    b3p = jnp.zeros((1, LANE), jnp.float32).at[:, :num_classes].set(b3)

    # (4) Batch tiling: pad batch to a multiple of the tile, stream x / out.
    tb = max(8, min(batch_tile, ((batch + 7) // 8) * 8))
    tb = (tb // 8) * 8
    n_tiles = pl.cdiv(batch, tb)
    padded_batch = n_tiles * tb
    if padded_batch != batch:
        x = jnp.pad(x, ((0, padded_batch - batch), (0, 0)))

    out = pl.pallas_call(
        ann_kernel,
        out_shape=jax.ShapeDtypeStruct((padded_batch, LANE), jnp.float32),
        grid_spec=pltpu.PrefetchScalarGridSpec(
            num_scalar_prefetch=0,
            grid=(n_tiles,),
            in_specs=[
                pl.BlockSpec((tb, bands), lambda i: (i, 0)),      # x (streamed)
                pl.BlockSpec((bands, LANE), lambda i: (0, 0)),    # w1 fused (resident)
                pl.BlockSpec((1, LANE), lambda i: (0, 0)),        # b1
                pl.BlockSpec((LANE, LANE), lambda i: (0, 0)),     # w2 padded
                pl.BlockSpec((1, LANE), lambda i: (0, 0)),        # b2 padded
                pl.BlockSpec((LANE, LANE), lambda i: (0, 0)),     # w3 padded
                pl.BlockSpec((1, LANE), lambda i: (0, 0)),        # b3 padded
            ],
            out_specs=pl.BlockSpec((tb, LANE), lambda i: (i, 0)),
        ),
        compiler_params=pltpu.CompilerParams(
            dimension_semantics=("parallel",)),
    )(x, w1f, b1, w2p, b2p, w3p, b3p)

    # Slice off batch padding and the padded class columns (must happen before
    # any downstream softmax/argmax).
    return out[:batch, :num_classes]


# --------------------------- parameter / glue code ---------------------------
def inverse_sigmoid(x):
    return -jnp.log(1.0 / x - 1.0)


def init_index_params(target_size):
    # torch.linspace(0.001, 0.99, target_size + 2), interior points, inv-sigmoid
    init_vals = jnp.linspace(0.001, 0.99, target_size + 2)
    return inverse_sigmoid(init_vals[1:target_size + 1]).astype(jnp.float32)


def build_interp_matrix(index_params, bands):
    """Dense (bands, target_size) matrix so that X @ W == linterp(X, sigmoid(idx))."""
    pos = jax.nn.sigmoid(index_params) * (bands - 1)           # (T,)
    lo = jnp.clip(jnp.floor(pos), 0, bands - 1).astype(jnp.int32)
    hi = jnp.clip(lo + 1, 0, bands - 1)
    frac = pos - lo.astype(jnp.float32)
    rows = jnp.arange(bands)[:, None]                          # (bands, 1)
    w = ((rows == lo[None, :]).astype(jnp.float32) * (1.0 - frac)[None, :]
         + (rows == hi[None, :]).astype(jnp.float32) * frac[None, :])
    return w.astype(jnp.float32)                               # (bands, T)


def init_fc_params(key, target_size, num_classes):
    k1, k2, k3, k4, k5, k6 = jax.random.split(key, 6)

    def uniform(k, shape, fan_in):
        bound = 1.0 / jnp.sqrt(fan_in)
        return jax.random.uniform(k, shape, jnp.float32, -bound, bound)

    # stored as (in, out); PyTorch Linear does x @ W.T + b, equivalent here.
    w1 = uniform(k1, (target_size, 128), target_size)
    b1 = uniform(k2, (1, 128), target_size)
    w2 = uniform(k3, (128, 64), 128)
    b2 = uniform(k4, (1, 64), 128)
    w3 = uniform(k5, (64, num_classes), 64)
    b3 = uniform(k6, (1, num_classes), 64)
    return w1, b1, w2, b2, w3, b3


def reference_forward(x, wi, w1, b1, w2, b2, w3, b3):
    s = x @ wi
    h1 = jnp.maximum(s @ w1 + b1, 0.0)
    h2 = jnp.maximum(h1 @ w2 + b2, 0.0)
    return h2 @ w3 + b3


# ----------------------------------- main ------------------------------------
if __name__ == "__main__":
    batch, bands = 256, 32
    target_size, num_classes = 8, 4

    key = jax.random.PRNGKey(0)
    kx, kfc = jax.random.split(key)

    # synthetic hyperspectral input (batch, bands)
    x = jax.random.normal(kx, (batch, bands), jnp.float32)

    # module parameters (deterministic, in-script)
    index_params = init_index_params(target_size)
    wi = build_interp_matrix(index_params, bands)
    w1, b1, w2, b2, w3, b3 = init_fc_params(kfc, target_size, num_classes)

    out = ann_forward_pallas(x, wi, w1, b1, w2, b2, w3, b3, batch_tile=128)
    out = jax.block_until_ready(out)

    ref = reference_forward(x, wi, w1, b1, w2, b2, w3, b3)
    assert out.shape == (batch, num_classes)
    assert jnp.allclose(out, ref, atol=1e-4, rtol=1e-4), (
        float(jnp.max(jnp.abs(out - ref))))

    print("KERNEL_OK")
</pallas_src>

<mosaic_0001>
module attributes {stable_mosaic.version = 11 : i64} {
  func.func @ann_kernel(%arg0: i32, %arg1: memref<128x32xf32, #tpu.memory_space<vmem>>, %arg2: memref<32x128xf32, #tpu.memory_space<vmem>>, %arg3: memref<1x128xf32, #tpu.memory_space<vmem>>, %arg4: memref<128x128xf32, #tpu.memory_space<vmem>>, %arg5: memref<1x128xf32, #tpu.memory_space<vmem>>, %arg6: memref<128x128xf32, #tpu.memory_space<vmem>>, %arg7: memref<1x128xf32, #tpu.memory_space<vmem>>, %arg8: memref<128x128xf32, #tpu.memory_space<vmem>>) attributes {dimension_semantics = [#tpu.dimension_semantics<parallel>], iteration_bounds = array<i64: 2>, scalar_prefetch = 0 : i64, scratch_operands = 0 : i64, tpu.core_type = #tpu.core_type<tc>, window_params = [{transform_indices = @transform_0, window_bounds = array<i64: 128, 32>}, {pipeline_mode = #tpu.pipeline_mode<synchronous>, transform_indices = @transform_1, window_bounds = array<i64: 32, 128>}, {pipeline_mode = #tpu.pipeline_mode<synchronous>, transform_indices = @transform_2, window_bounds = array<i64: 1, 128>}, {pipeline_mode = #tpu.pipeline_mode<synchronous>, transform_indices = @transform_3, window_bounds = array<i64: 128, 128>}, {pipeline_mode = #tpu.pipeline_mode<synchronous>, transform_indices = @transform_4, window_bounds = array<i64: 1, 128>}, {pipeline_mode = #tpu.pipeline_mode<synchronous>, transform_indices = @transform_5, window_bounds = array<i64: 128, 128>}, {pipeline_mode = #tpu.pipeline_mode<synchronous>, transform_indices = @transform_6, window_bounds = array<i64: 1, 128>}, {transform_indices = @transform_7, window_bounds = array<i64: 128, 128>}]} {
    %c0 = arith.constant 0 : index
    %c0_0 = arith.constant 0 : index
    %0 = vector.load %arg1[%c0, %c0_0] : memref<128x32xf32, #tpu.memory_space<vmem>>, vector<128x32xf32>
    %c0_1 = arith.constant 0 : index
    %c0_2 = arith.constant 0 : index
    %1 = vector.load %arg2[%c0_1, %c0_2] : memref<32x128xf32, #tpu.memory_space<vmem>>, vector<32x128xf32>
    %cst = arith.constant dense<0.000000e+00> : vector<128x128xf32>
    %2 = tpu.matmul %0, %1, %cst {dimension_numbers = #tpu.dot_dimension_numbers<[1], [0], [0], [1], [0, 0, 1, 1], [], []>} : vector<128x32xf32>, vector<32x128xf32>, vector<128x128xf32> -> vector<128x128xf32>
    %c0_3 = arith.constant 0 : index
    %c0_4 = arith.constant 0 : index
    %3 = vector.load %arg3[%c0_3, %c0_4] : memref<1x128xf32, #tpu.memory_space<vmem>>, vector<1x128xf32>
    %4 = vector.broadcast %3 : vector<1x128xf32> to vector<128x128xf32>
    %5 = arith.addf %2, %4 : vector<128x128xf32>
    %cst_5 = arith.constant 0.000000e+00 : f32
    %6 = vector.broadcast %cst_5 : f32 to vector<128x128xf32>
    %7 = arith.maximumf %5, %6 : vector<128x128xf32>
    %c0_6 = arith.constant 0 : index
    %c0_7 = arith.constant 0 : index
    %8 = vector.load %arg4[%c0_6, %c0_7] : memref<128x128xf32, #tpu.memory_space<vmem>>, vector<128x128xf32>
    %cst_8 = arith.constant dense<0.000000e+00> : vector<128x128xf32>
    %9 = tpu.matmul %7, %8, %cst_8 {dimension_numbers = #tpu.dot_dimension_numbers<[1], [0], [0], [1], [0, 0, 1, 1], [], []>} : vector<128x128xf32>, vector<128x128xf32>, vector<128x128xf32> -> vector<128x128xf32>
    %c0_9 = arith.constant 0 : index
    %c0_10 = arith.constant 0 : index
    %10 = vector.load %arg5[%c0_9, %c0_10] : memref<1x128xf32, #tpu.memory_space<vmem>>, vector<1x128xf32>
    %11 = vector.broadcast %10 : vector<1x128xf32> to vector<128x128xf32>
    %12 = arith.addf %9, %11 : vector<128x128xf32>
    %cst_11 = arith.constant 0.000000e+00 : f32
    %13 = vector.broadcast %cst_11 : f32 to vector<128x128xf32>
    %14 = arith.maximumf %12, %13 : vector<128x128xf32>
    %c0_12 = arith.constant 0 : index
    %c0_13 = arith.constant 0 : index
    %15 = vector.load %arg6[%c0_12, %c0_13] : memref<128x128xf32, #tpu.memory_space<vmem>>, vector<128x128xf32>
    %cst_14 = arith.constant dense<0.000000e+00> : vector<128x128xf32>
    %16 = tpu.matmul %14, %15, %cst_14 {dimension_numbers = #tpu.dot_dimension_numbers<[1], [0], [0], [1], [0, 0, 1, 1], [], []>} : vector<128x128xf32>, vector<128x128xf32>, vector<128x128xf32> -> vector<128x128xf32>
    %c0_15 = arith.constant 0 : index
    %c0_16 = arith.constant 0 : index
    %17 = vector.load %arg7[%c0_15, %c0_16] : memref<1x128xf32, #tpu.memory_space<vmem>>, vector<1x128xf32>
    %18 = vector.broadcast %17 : vector<1x128xf32> to vector<128x128xf32>
    %19 = arith.addf %16, %18 : vector<128x128xf32>
    %c0_17 = arith.constant 0 : index
    %c0_18 = arith.constant 0 : index
    %20 = vector.load %arg8[%c0_17, %c0_18] : memref<128x128xf32, #tpu.memory_space<vmem>>, vector<128x128xf32>
    tpu.vector_store %arg8[%c0_17, %c0_18], %19 {strides = array<i32>} : memref<128x128xf32, #tpu.memory_space<vmem>>, vector<128x128xf32>,
    return
  }
  func.func @transform_0(%arg0: i32) -> (i32, i32) {
    %c0_i32 = arith.constant 0 : i32
    %c0_i32_0 = arith.constant 0 : i32
    return %arg0, %c0_i32 : i32, i32
  }
  func.func @transform_1(%arg0: i32) -> (i32, i32) {
    %c0_i32 = arith.constant 0 : i32
    %c0_i32_0 = arith.constant 0 : i32
    %c0_i32_1 = arith.constant 0 : i32
    return %c0_i32, %c0_i32_0 : i32, i32
  }
  func.func @transform_2(%arg0: i32) -> (i32, i32) {
    %c0_i32 = arith.constant 0 : i32
    %c0_i32_0 = arith.constant 0 : i32
    %c0_i32_1 = arith.constant 0 : i32
    return %c0_i32, %c0_i32_0 : i32, i32
  }
  func.func @transform_3(%arg0: i32) -> (i32, i32) {
    %c0_i32 = arith.constant 0 : i32
    %c0_i32_0 = arith.constant 0 : i32
    %c0_i32_1 = arith.constant 0 : i32
    return %c0_i32, %c0_i32_0 : i32, i32
  }
  func.func @transform_4(%arg0: i32) -> (i32, i32) {
    %c0_i32 = arith.constant 0 : i32
    %c0_i32_0 = arith.constant 0 : i32
    %c0_i32_1 = arith.constant 0 : i32
    return %c0_i32, %c0_i32_0 : i32, i32
  }
  func.func @transform_5(%arg0: i32) -> (i32, i32) {
    %c0_i32 = arith.constant 0 : i32
    %c0_i32_0 = arith.constant 0 : i32
    %c0_i32_1 = arith.constant 0 : i32
    return %c0_i32, %c0_i32_0 : i32, i32
  }
  func.func @transform_6(%arg0: i32) -> (i32, i32) {
    %c0_i32 = arith.constant 0 : i32
    %c0_i32_0 = arith.constant 0 : i32
    %c0_i32_1 = arith.constant 0 : i32
    return %c0_i32, %c0_i32_0 : i32, i32
  }
  func.func @transform_7(%arg0: i32) -> (i32, i32) {
    %c0_i32 = arith.constant 0 : i32
    %c0_i32_0 = arith.constant 0 : i32
    return %arg0, %c0_i32 : i32, i32
  }
}

</mosaic_0001>

<llo_original>
// kernel: tpu_custom_call.1
$region0: #{tpu_custom_call.1}
  #allocation0 [shape = 'u32[]', space=smem, size = 0x4, offset = 0x4, fixed_abs, tag = 'smem constant byte address 0x4 - core index']
  #allocation1 [shape = 'u32[144,128]{1,0:T(1,128)}', space=vmem, size = 0x12000, scoped, tag = 'internal scratch']
  %s0 = inlined_call_operand.vmem [shape: f32[256,32], index: 0, kind: input, shape index: {}]
  %s1 = inlined_call_operand.vmem [shape: f32[32,128], index: 1, kind: input, shape index: {}]
  %s2 = inlined_call_operand.vmem [shape: f32[1,128], index: 2, kind: input, shape index: {}]
  %s3 = inlined_call_operand.vmem [shape: f32[128,128], index: 3, kind: input, shape index: {}]
  %s4 = inlined_call_operand.vmem [shape: f32[1,128], index: 4, kind: input, shape index: {}]
  %s5 = inlined_call_operand.vmem [shape: f32[128,128], index: 5, kind: input, shape index: {}]
  %s6 = inlined_call_operand.vmem [shape: f32[1,128], index: 6, kind: input, shape index: {}]
  %s7 = inlined_call_operand.hbm [shape: f32[256,128], index: 7, kind: output, shape index: {}]
  %s8 = sld [smem:[#allocation0]]
  $region61: #{tpu_custom_call.1} parent=0
    _
  %s10 = ssub.s32 1, %s8
  %s11 = scalar_select 0, %s10, %s8
  $region1: #{tpu_custom_call.1} parent=0
    #allocation2 [shape = 'u8[131072]{0}', space=vmem, size = 0x20000, scoped, tag = 'output window, operand 0']
    #allocation3 [shape = 's32[2]{0}', space=sflag, size = 0x8, scoped, tag = 'scoped memory for tpu_custom_call.1']
    %12 = vsyncpa [#allocation3], 0
    %s13 = scalar_lea.sflag [#allocation3], 1
    %14 = vsyncpa %s13, 0
    loop: start=0, step=1, limit=4
    $region2: #{tpu_custom_call.1} parent=1 // loop_pre_header
      _
    $region3: #{tpu_custom_call.1} parent=1 // loop_header
      %s16 = sphi 0, %s20
      %p17 = scmp.ge.s32.totalorder %s16, 4
      %s26 = sphi 0, %s28
      %s29 = sphi 0, %s26
      %s30 = sphi 0, %s29
      %s46 = sphi 0, %s30
      %s50 = sphi 0, %s50
      %s52 = sphi 0, %s50
      %s53 = sphi 0, %s52
      %s67 = sphi 0, %s53
      %s71 = sphi 0, %s71
      %s73 = sphi 0, %s71
      %s74 = sphi 0, %s73
      %s88 = sphi 0, %s74
      %s92 = sphi 0, %s92
      %s94 = sphi 0, %s92
      %s95 = sphi 0, %s94
      %s109 = sphi 0, %s95
      %s113 = sphi 0, %s113
      %s115 = sphi 0, %s113
      %s116 = sphi 0, %s115
      %s130 = sphi 0, %s116
      %s134 = sphi 0, %s134
      %s136 = sphi 0, %s134
      %s137 = sphi 0, %s136
      %s151 = sphi 0, %s137
      %s155 = sphi 0, %s155
      %s157 = sphi 0, %s155
      %s158 = sphi 0, %s157
      %s172 = sphi 0, %s158
      %s178 = sphi 0, %s180
      %s181 = sphi 0, %s178
      %s182 = sphi 0, %s181
      %s198 = sphi 0, %s182
    $region4: #{tpu_custom_call.1} parent=1 // loop_header_branch
      %19 = sbr.rel (%p17) target = $region8
    $region5: #{tpu_custom_call.1} parent=1 // loop_body
      %s21 = ssub.s32 %s16, 1
      %s22 = ssub.s32 %s16, 2
      %s23 = sadd.s32 %s16, 1
      %s24 = ssub.s32 %s16, %s23
      %p25 = scmp.eq.s32.totalorder %s24, 0
      %s27 = sadd.s32 %s26, 1
      %s28 = scalar_select %p25, %s26, %s27
      %p31 = pneg %p25
      %p32 = scmp.eq.s32.totalorder %s16, 1
      %p33 = por %p31, %p32
      %p34 = scmp.ne.s32.totalorder %s26, %s29
      %p35 = scmp.eq.s32.totalorder %s16, 0
      %p36 = por %p34, %p35
      %p37 = scmp.ne.s32.totalorder %s26, %s29
      %p38 = scmp.eq.s32.totalorder %s21, 1
      %p39 = por %p37, %p38
      %p40 = scmp.ne.s32.totalorder %s29, %s30
      %p41 = scmp.eq.s32.totalorder %s21, 0
      %p42 = por %p40, %p41
      %p43 = scmp.ne.s32.totalorder %s29, %s30
      %p44 = scmp.eq.s32.totalorder %s22, 1
      %p45 = por %p43, %p44
      %p47 = scmp.ne.s32.totalorder %s30, %s46
      %p48 = scmp.eq.s32.totalorder %s22, 0
      %p49 = por %p47, %p48
      %s51 = sadd.s32 %s50, 1
      %p54 = scmp.eq.s32.totalorder %s16, 1
      %p55 = scmp.ne.s32.totalorder %s50, %s52
      %p56 = scmp.eq.s32.totalorder %s16, 0
      %p57 = por %p55, %p56
      %p58 = scmp.ne.s32.totalorder %s50, %s52
      %p59 = scmp.eq.s32.totalorder %s21, 1
      %p60 = por %p58, %p59
      %p61 = scmp.ne.s32.totalorder %s52, %s53
      %p62 = scmp.eq.s32.totalorder %s21, 0
      %p63 = por %p61, %p62
      %p64 = scmp.ne.s32.totalorder %s52, %s53
      %p65 = scmp.eq.s32.totalorder %s22, 1
      %p66 = por %p64, %p65
      %p68 = scmp.ne.s32.totalorder %s53, %s67
      %p69 = scmp.eq.s32.totalorder %s22, 0
      %p70 = por %p68, %p69
      %s72 = sadd.s32 %s71, 1
      %p75 = scmp.eq.s32.totalorder %s16, 1
      %p76 = scmp.ne.s32.totalorder %s71, %s73
      %p77 = scmp.eq.s32.totalorder %s16, 0
      %p78 = por %p76, %p77
      %p79 = scmp.ne.s32.totalorder %s71, %s73
      %p80 = scmp.eq.s32.totalorder %s21, 1
      %p81 = por %p79, %p80
      %p82 = scmp.ne.s32.totalorder %s73, %s74
      %p83 = scmp.eq.s32.totalorder %s21, 0
      %p84 = por %p82, %p83
      %p85 = scmp.ne.s32.totalorder %s73, %s74
      %p86 = scmp.eq.s32.totalorder %s22, 1
      %p87 = por %p85, %p86
      %p89 = scmp.ne.s32.totalorder %s74, %s88
      %p90 = scmp.eq.s32.totalorder %s22, 0
      %p91 = por %p89, %p90
      %s93 = sadd.s32 %s92, 1
      %p96 = scmp.eq.s32.totalorder %s16, 1
      %p97 = scmp.ne.s32.totalorder %s92, %s94
      %p98 = scmp.eq.s32.totalorder %s16, 0
      %p99 = por %p97, %p98
      %p100 = scmp.ne.s32.totalorder %s92, %s94
      %p101 = scmp.eq.s32.totalorder %s21, 1
      %p102 = por %p100, %p101
      %p103 = scmp.ne.s32.totalorder %s94, %s95
      %p104 = scmp.eq.s32.totalorder %s21, 0
      %p105 = por %p103, %p104
      %p106 = scmp.ne.s32.totalorder %s94, %s95
      %p107 = scmp.eq.s32.totalorder %s22, 1
      %p108 = por %p106, %p107
      %p110 = scmp.ne.s32.totalorder %s95, %s109
      %p111 = scmp.eq.s32.totalorder %s22, 0
      %p112 = por %p110, %p111
      %s114 = sadd.s32 %s113, 1
      %p117 = scmp.eq.s32.totalorder %s16, 1
      %p118 = scmp.ne.s32.totalorder %s113, %s115
      %p119 = scmp.eq.s32.totalorder %s16, 0
      %p120 = por %p118, %p119
      %p121 = scmp.ne.s32.totalorder %s113, %s115
      %p122 = scmp.eq.s32.totalorder %s21, 1
      %p123 = por %p121, %p122
      %p124 = scmp.ne.s32.totalorder %s115, %s116
      %p125 = scmp.eq.s32.totalorder %s21, 0
      %p126 = por %p124, %p125
      %p127 = scmp.ne.s32.totalorder %s115, %s116
      %p128 = scmp.eq.s32.totalorder %s22, 1
      %p129 = por %p127, %p128
      %p131 = scmp.ne.s32.totalorder %s116, %s130
      %p132 = scmp.eq.s32.totalorder %s22, 0
      %p133 = por %p131, %p132
      %s135 = sadd.s32 %s134, 1
      %p138 = scmp.eq.s32.totalorder %s16, 1
      %p139 = scmp.ne.s32.totalorder %s134, %s136
      %p140 = scmp.eq.s32.totalorder %s16, 0
      %p141 = por %p139, %p140
      %p142 = scmp.ne.s32.totalorder %s134, %s136
      %p143 = scmp.eq.s32.totalorder %s21, 1
      %p144 = por %p142, %p143
      %p145 = scmp.ne.s32.totalorder %s136, %s137
      %p146 = scmp.eq.s32.totalorder %s21, 0
      %p147 = por %p145, %p146
      %p148 = scmp.ne.s32.totalorder %s136, %s137
      %p149 = scmp.eq.s32.totalorder %s22, 1
      %p150 = por %p148, %p149
      %p152 = scmp.ne.s32.totalorder %s137, %s151
      %p153 = scmp.eq.s32.totalorder %s22, 0
      %p154 = por %p152, %p153
      %s156 = sadd.s32 %s155, 1
      %p159 = scmp.eq.s32.totalorder %s16, 1
      %p160 = scmp.ne.s32.totalorder %s155, %s157
      %p161 = scmp.eq.s32.totalorder %s16, 0
      %p162 = por %p160, %p161
      %p163 = scmp.ne.s32.totalorder %s155, %s157
      %p164 = scmp.eq.s32.totalorder %s21, 1
      %p165 = por %p163, %p164
      %p166 = scmp.ne.s32.totalorder %s157, %s158
      %p167 = scmp.eq.s32.totalorder %s21, 0
      %p168 = por %p166, %p167
      %p169 = scmp.ne.s32.totalorder %s157, %s158
      %p170 = scmp.eq.s32.totalorder %s22, 1
      %p171 = por %p169, %p170
      %p173 = scmp.ne.s32.totalorder %s158, %s172
      %p174 = scmp.eq.s32.totalorder %s22, 0
      %p175 = por %p173, %p174
      %s176 = ssub.s32 %s16, %s23
      %p177 = scmp.eq.s32.totalorder %s176, 0
      %s179 = sadd.s32 %s178, 1
      %s180 = scalar_select %p177, %s178, %s179
      %p183 = pneg %p177
      %p184 = scmp.eq.s32.totalorder %s16, 1
      %p185 = por %p183, %p184
      %p186 = scmp.ne.s32.totalorder %s178, %s181
      %p187 = scmp.eq.s32.totalorder %s16, 0
      %p188 = por %p186, %p187
      %p189 = scmp.ne.s32.totalorder %s178, %s181
      %p190 = scmp.eq.s32.totalorder %s21, 1
      %p191 = por %p189, %p190
      %p192 = scmp.ne.s32.totalorder %s181, %s182
      %p193 = scmp.eq.s32.totalorder %s21, 0
      %p194 = por %p192, %p193
      %p195 = scmp.ne.s32.totalorder %s181, %s182
      %p196 = scmp.eq.s32.totalorder %s22, 1
      %p197 = por %p195, %p196
      %p199 = scmp.ne.s32.totalorder %s182, %s198
      %p200 = scmp.eq.s32.totalorder %s22, 0
      %p201 = por %p199, %p200
      %p202 = scmp.le.s32.totalorder 1, %s16
      %p203 = scmp.lt.s32.totalorder %s16, 3
      %p204 = pnand %p202, %p203
      %p205 = pneg %p204
      // Predicated region
      $region9: #{tpu_custom_call.1} parent=5 // pred_check
        _
      $region10: #{tpu_custom_call.1} parent=5 // pred_check_branch
        %207 = sbr.rel (%p204) target = $region12
      $region11: #{tpu_custom_call.1} parent=5 // pred_region
        %s208 = ssub.s32 %s16, 1
        // Predicated region
        $region13: #{tpu_custom_call.1} parent=11 // pred_check
          %p209 = pneg %p63
        $region14: #{tpu_custom_call.1} parent=11 // pred_check_branch
          %211 = sbr.rel (%p209) target = $region16
        $region15: #{tpu_custom_call.1} parent=11 // pred_region
          _
        $region16: #{tpu_custom_call.1} parent=11 // pred_fallthru
          _
        // Predicated region
        $region17: #{tpu_custom_call.1} parent=11 // pred_check
          %p212 = pneg %p84
        $region18: #{tpu_custom_call.1} parent=11 // pred_check_branch
          %214 = sbr.rel (%p212) target = $region20
        $region19: #{tpu_custom_call.1} parent=11 // pred_region
          _
        $region20: #{tpu_custom_call.1} parent=11 // pred_fallthru
          _
        // Predicated region
        $region21: #{tpu_custom_call.1} parent=11 // pred_check
          %p215 = pneg %p105
        $region22: #{tpu_custom_call.1} parent=11 // pred_check_branch
          %217 = sbr.rel (%p215) target = $region24
        $region23: #{tpu_custom_call.1} parent=11 // pred_region
          _
        $region24: #{tpu_custom_call.1} parent=11 // pred_fallthru
          _
        // Predicated region
        $region25: #{tpu_custom_call.1} parent=11 // pred_check
          %p218 = pneg %p126
        $region26: #{tpu_custom_call.1} parent=11 // pred_check_branch
          %220 = sbr.rel (%p218) target = $region28
        $region27: #{tpu_custom_call.1} parent=11 // pred_region
          _
        $region28: #{tpu_custom_call.1} parent=11 // pred_fallthru
          _
        // Predicated region
        $region29: #{tpu_custom_call.1} parent=11 // pred_check
          %p221 = pneg %p147
        $region30: #{tpu_custom_call.1} parent=11 // pred_check_branch
          %223 = sbr.rel (%p221) target = $region32
        $region31: #{tpu_custom_call.1} parent=11 // pred_region
          _
        $region32: #{tpu_custom_call.1} parent=11 // pred_fallthru
          _
        // Predicated region
        $region33: #{tpu_custom_call.1} parent=11 // pred_check
          %p224 = pneg %p168
        $region34: #{tpu_custom_call.1} parent=11 // pred_check_branch
          %226 = sbr.rel (%p224) target = $region36
        $region35: #{tpu_custom_call.1} parent=11 // pred_region
          _
        $region36: #{tpu_custom_call.1} parent=11 // pred_fallthru
          _
      $region12: #{tpu_custom_call.1} parent=5 // pred_fallthru
        _
      %p227 = scmp.lt.s32.totalorder %s16, 2
      // Predicated region
      $region37: #{tpu_custom_call.1} parent=5 // pred_check
        %p228 = pneg %p227
      $region38: #{tpu_custom_call.1} parent=5 // pred_check_branch
        %230 = sbr.rel (%p228) target = $region40
      $region39: #{tpu_custom_call.1} parent=5 // pred_region
        // Predicated region
        $region41: #{tpu_custom_call.1} parent=39 // pred_check
          %p231 = pneg %p36
        $region42: #{tpu_custom_call.1} parent=39 // pred_check_branch
          %233 = sbr.rel (%p231) target = $region44
        $region43: #{tpu_custom_call.1} parent=39 // pred_region
          %s234 = smul.u32 16, %s16
          %p235 = scmp.lt.s32.totalorder %s234, 31
          %s236 = scalar_select %p235, %s234, 31
          %s237 = smul.addr %s236, 8
          %s238 = scalar_lea.vmem %s0, %s237
          %s239 = smul.u32 16, %s16
        $region44: #{tpu_custom_call.1} parent=39 // pred_fallthru
          _
      $region40: #{tpu_custom_call.1} parent=5 // pred_fallthru
        _
      %p240 = scmp.le.s32.totalorder 1, %s16
      %p241 = scmp.lt.s32.totalorder %s16, 3
      %p242 = pnand %p240, %p241
      %p243 = pneg %p242
      // Predicated region
      $region45: #{tpu_custom_call.1} parent=5 // pred_check
        _
      $region46: #{tpu_custom_call.1} parent=5 // pred_check_branch
        %245 = sbr.rel (%p242) target = $region48
      $region47: #{tpu_custom_call.1} parent=5 // pred_region
        %s246 = ssub.s32 %s16, 1
        %s247 = smul.u32 16, %s21
        %p248 = scmp.lt.s32.totalorder %s247, 31
        %s249 = scalar_select %p248, %s247, 31
        %s250 = smul.addr %s249, 8
        %s251 = scalar_lea.vmem %s0, %s250
        %p252 = pneg %p42
        %p253 = pneg %p39
        %p254 = pneg %p63
        %p255 = pneg %p60
        %p256 = pneg %p84
        %p257 = pneg %p81
        %p258 = pneg %p105
        %p259 = pneg %p102
        %p260 = pneg %p126
        %p261 = pneg %p123
        %p262 = pneg %p147
        %p263 = pneg %p144
        %p264 = pneg %p168
        %p265 = pneg %p165
        %p266 = pneg %p194
        %p267 = pneg %p191
        %s268 = sand.u32 %s181, 1
        %s269 = scalar_lea.sflag [#allocation3], %s268
        %s270 = sand.u32 %s181, 1
        %s271 = smul.addr %s270, 128
        %s272 = scalar_lea.vmem [#allocation2], %s271
        %s273 = smul.u32 16, %s21
        %p274 = scmp.lt.s32.totalorder %s273, 31
        %s275 = scalar_select %p274, %s273, 31
        %s276 = smul.addr %s275, 8
        %s277 = scalar_lea.vmem %s0, %s276
        %s278 = smul.u32 16, %s21
        %s279 = smul.u32 16, %s21
        %v280 = vld [vmem:[%s277] sm:$0xff]
        %v281 = vld [vmem:[%s277 + $0x8] sm:$0xff]
        %v282 = vld [vmem:[%s277 + $0x10] sm:$0xff]
        %v283 = vld [vmem:[%s277 + $0x18] sm:$0xff]
        %v284 = vld [vmem:[%s277 + $0x20] sm:$0xff]
        %v285 = vld [vmem:[%s277 + $0x28] sm:$0xff]
        %v286 = vld [vmem:[%s277 + $0x30] sm:$0xff]
        %v287 = vld [vmem:[%s277 + $0x38] sm:$0xff]
        %v288 = vld [vmem:[%s277 + $0x40] sm:$0xff]
        %v289 = vld [vmem:[%s277 + $0x48] sm:$0xff]
        %v290 = vld [vmem:[%s277 + $0x50] sm:$0xff]
        %v291 = vld [vmem:[%s277 + $0x58] sm:$0xff]
        %v292 = vld [vmem:[%s277 + $0x60] sm:$0xff]
        %v293 = vld [vmem:[%s277 + $0x68] sm:$0xff]
        %v294 = vld [vmem:[%s277 + $0x70] sm:$0xff]
        %v295 = vld [vmem:[%s277 + $0x78] sm:$0xff]
        %v296 = vld [vmem:[%s1] sm:$0xff]
        %v297 = vld [vmem:[%s1 + $0x8] sm:$0xff]
        %v298 = vld [vmem:[%s1 + $0x10] sm:$0xff]
        %v299 = vld [vmem:[%s1 + $0x18] sm:$0xff]
        %v300 = vld [vmem:[%s2] sm:$0x1]
        %v302 = vlaneseq
        %v303 = vshrl.u32 %v302, 7
        %v304 = vsub.s32 0, %v303
        %v305 = vrot.slane %v300, %v304
        %vm307 = vcmask 261120
        %v309 = vsel %vm307, %v280, 0
        %v312 = vsel %vm307, %v281, 0
        %v315 = vsel %vm307, %v282, 0
        %v318 = vsel %vm307, %v283, 0
        %v321 = vsel %vm307, %v284, 0
        %v324 = vsel %vm307, %v285, 0
        %v327 = vsel %vm307, %v286, 0
        %v330 = vsel %vm307, %v287, 0
        %v333 = vsel %vm307, %v288, 0
        %v336 = vsel %vm307, %v289, 0
        %v339 = vsel %vm307, %v290, 0
        %v342 = vsel %vm307, %v291, 0
        %v345 = vsel %vm307, %v292, 0
        %v348 = vsel %vm307, %v293, 0
        %v351 = vsel %vm307, %v294, 0
        %v354 = vsel %vm307, %v295, 0
        %356 = vmatprep.subr.mxu0 0.0
        %357 = vmatpush1.msra.mxu0 %v296
        %358 = vmatprep.subr.mxu0 0.0
        %359 = vmatpush1.msra.mxu0 %v297
        %360 = vmatprep.subr.mxu0 0.0
        %361 = vmatpush1.msra.mxu0 %v298
        %362 = vmatprep.subr.mxu0 0.0
        %363 = vmatpush1.msra.mxu0 %v299
        %364 = vmatprep.subr.mxu0 0.0
        %365 = vmatpush1.msra.mxu0 0.0
        %366 = vmatprep.subr.mxu0 0.0
        %367 = vmatpush1.msra.mxu0 0.0
        %368 = vmatprep.subr.mxu0 0.0
        %369 = vmatpush1.msra.mxu0 0.0
        %370 = vmatprep.subr.mxu0 0.0
        %371 = vmatpush1.msra.mxu0 0.0
        %372 = vmatprep.subr.mxu0 0.0
        %373 = vmatpush1.msra.mxu0 0.0
        %374 = vmatprep.subr.mxu0 0.0
        %375 = vmatpush1.msra.mxu0 0.0
        %376 = vmatprep.subr.mxu0 0.0
        %377 = vmatpush1.msra.mxu0 0.0
        %378 = vmatprep.subr.mxu0 0.0
        %379 = vmatpush1.msra.mxu0 0.0
        %380 = vmatprep.subr.mxu0 0.0
        %381 = vmatpush1.msra.mxu0 0.0
        %382 = vmatprep.subr.mxu0 0.0
        %383 = vmatpush1.msra.mxu0 0.0
        %384 = vmatprep.subr.mxu0 0.0
        %385 = vmatpush1.msra.mxu0 0.0
        %386 = vmatprep.subr.mxu0 0.0
        %387 = vmatpush1.msra.mxu0 0.0
        %388 = vmatprep.subr.mxu0 0.0
        %389 = vmatpush1.msra.mxu0 0.0
        %390 = vmatprep.subr.mxu0 0.0
        %391 = vmatpush1.msra.mxu0 0.0
        %392 = vmatprep.subr.mxu0 0.0
        %393 = vmatpush1.msra.mxu0 0.0
        %394 = vmatprep.subr.mxu0 0.0
        %395 = vmatpush1.msra.mxu0 0.0
        %396 = vmatprep.subr.mxu0 0.0
        %397 = vmatpush1.msra.mxu0 0.0
        %398 = vmatprep.subr.mxu0 0.0
        %399 = vmatpush1.msra.mxu0 0.0
        %400 = vmatprep.subr.mxu0 0.0
        %401 = vmatpush1.msra.mxu0 0.0
        %402 = vmatprep.subr.mxu0 0.0
        %403 = vmatpush1.msra.mxu0 0.0
        %404 = vmatprep.subr.mxu0 0.0
        %405 = vmatpush1.msra.mxu0 0.0
        %406 = vmatprep.subr.mxu0 0.0
        %407 = vmatpush1.msra.mxu0 0.0
        %408 = vmatprep.subr.mxu0 0.0
        %409 = vmatpush1.msra.mxu0 0.0
        %410 = vmatprep.subr.mxu0 0.0
        %411 = vmatpush1.msra.mxu0 0.0
        %412 = vmatprep.subr.mxu0 0.0
        %413 = vmatpush1.msra.mxu0 0.0
        %414 = vmatprep.subr.mxu0 0.0
        %415 = vmatpush1.msra.mxu0 0.0
        %416 = vmatprep.subr.mxu0 0.0
        %417 = vmatpush1.msra.mxu0 0.0
        %418 = vmatprep.subr.mxu0 0.0
        %419 = vmatpush1.msra.mxu0 0.0
        %420 = vmatprep.mubr.f32.mxu0 0.0
        %421 = vmatmul.mubr.f32.gmra.mrb[0].mxu0 %v309
        %v422 = vpop.f32.mrb[0].mxu0
        %v423 = vadd.f32 %v305, %v422
        %v424 = vpop.f32.mrb[0].mxu0
        %425 = vmatprep.mubr.f32.mxu0 0.0
        %426 = vmatmul.mubr.f32.gmra.mrb[0].mxu0 %v312
        %v427 = vpop.f32.mrb[0].mxu0
        %v428 = vadd.f32 %v305, %v427
        %v429 = vpop.f32.mrb[0].mxu0
        %430 = vmatprep.mubr.f32.mxu0 0.0
        %431 = vmatmul.mubr.f32.gmra.mrb[0].mxu0 %v315
        %v432 = vpop.f32.mrb[0].mxu0
        %v433 = vadd.f32 %v305, %v432
        %v434 = vpop.f32.mrb[0].mxu0
        %435 = vmatprep.mubr.f32.mxu0 0.0
        %436 = vmatmul.mubr.f32.gmra.mrb[0].mxu0 %v318
        %v437 = vpop.f32.mrb[0].mxu0
        %v438 = vadd.f32 %v305, %v437
        %v439 = vpop.f32.mrb[0].mxu0
        %440 = vmatprep.mubr.f32.mxu0 0.0
        %441 = vmatmul.mubr.f32.gmra.mrb[0].mxu0 %v321
        %v442 = vpop.f32.mrb[0].mxu0
        %v443 = vadd.f32 %v305, %v442
        %v444 = vpop.f32.mrb[0].mxu0
        %445 = vmatprep.mubr.f32.mxu0 0.0
        %446 = vmatmul.mubr.f32.gmra.mrb[0].mxu0 %v324
        %v447 = vpop.f32.mrb[0].mxu0
        %v448 = vadd.f32 %v305, %v447
        %v449 = vpop.f32.mrb[0].mxu0
        %450 = vmatprep.mubr.f32.mxu0 0.0
        %451 = vmatmul.mubr.f32.gmra.mrb[0].mxu0 %v327
        %v452 = vpop.f32.mrb[0].mxu0
        %v453 = vadd.f32 %v305, %v452
        %v454 = vpop.f32.mrb[0].mxu0
        %455 = vmatprep.mubr.f32.mxu0 0.0
        %456 = vmatmul.mubr.f32.gmra.mrb[0].mxu0 %v330
        %v457 = vpop.f32.mrb[0].mxu0
        %v458 = vadd.f32 %v305, %v457
        %v459 = vpop.f32.mrb[0].mxu0
        %460 = vmatprep.mubr.f32.mxu0 0.0
        %461 = vmatmul.mubr.f32.gmra.mrb[0].mxu0 %v333
        %v462 = vpop.f32.mrb[0].mxu0
        %v463 = vadd.f32 %v305, %v462
        %v464 = vpop.f32.mrb[0].mxu0
        %465 = vmatprep.mubr.f32.mxu0 0.0
        %466 = vmatmul.mubr.f32.gmra.mrb[0].mxu0 %v336
        %v467 = vpop.f32.mrb[0].mxu0
        %v468 = vadd.f32 %v305, %v467
        %v469 = vpop.f32.mrb[0].mxu0
        %470 = vmatprep.mubr.f32.mxu0 0.0
        %471 = vmatmul.mubr.f32.gmra.mrb[0].mxu0 %v339
        %v472 = vpop.f32.mrb[0].mxu0
        %v473 = vadd.f32 %v305, %v472
        %v474 = vpop.f32.mrb[0].mxu0
        %475 = vmatprep.mubr.f32.mxu0 0.0
        %476 = vmatmul.mubr.f32.gmra.mrb[0].mxu0 %v342
        %v477 = vpop.f32.mrb[0].mxu0
        %v478 = vadd.f32 %v305, %v477
        %v479 = vpop.f32.mrb[0].mxu0
        %480 = vmatprep.mubr.f32.mxu0 0.0
        %481 = vmatmul.mubr.f32.gmra.mrb[0].mxu0 %v345
        %v482 = vpop.f32.mrb[0].mxu0
        %v483 = vadd.f32 %v305, %v482
        %v484 = vpop.f32.mrb[0].mxu0
        %485 = vmatprep.mubr.f32.mxu0 0.0
        %486 = vmatmul.mubr.f32.gmra.mrb[0].mxu0 %v348
        %v487 = vpop.f32.mrb[0].mxu0
        %v488 = vadd.f32 %v305, %v487
        %v489 = vpop.f32.mrb[0].mxu0
        %490 = vmatprep.mubr.f32.mxu0 0.0
        %491 = vmatmul.mubr.f32.gmra.mrb[0].mxu0 %v351
        %v492 = vpop.f32.mrb[0].mxu0
        %v493 = vadd.f32 %v305, %v492
        %v494 = vpop.f32.mrb[0].mxu0
        %495 = vmatprep.mubr.f32.mxu0 0.0
        %496 = vmatmul.mubr.f32.gmra.mrb[0].mxu0 %v354
        %v497 = vpop.f32.mrb[0].mxu0
        %v498 = vadd.f32 %v305, %v497
        %v499 = vpop.f32.mrb[0].mxu0
        %500 = vdwg.mxu0
        %v501 = vmax.f32 %v423, 0.0
        %v502 = vmax.f32 %v428, 0.0
        %v503 = vmax.f32 %v433, 0.0
        %v504 = vmax.f32 %v438, 0.0
        %v505 = vmax.f32 %v443, 0.0
        %v506 = vmax.f32 %v448, 0.0
        %v507 = vmax.f32 %v453, 0.0
        %v508 = vmax.f32 %v458, 0.0
        %v509 = vmax.f32 %v463, 0.0
        %v510 = vmax.f32 %v468, 0.0
        %v511 = vmax.f32 %v473, 0.0
        %v512 = vmax.f32 %v478, 0.0
        %v513 = vmax.f32 %v483, 0.0
        %v514 = vmax.f32 %v488, 0.0
        %v515 = vmax.f32 %v493, 0.0
        %v516 = vmax.f32 %v498, 0.0
        %v517 = vld [vmem:[%s3] sm:$0xff]
        %v518 = vld [vmem:[%s3 + $0x8] sm:$0xff]
        %v519 = vld [vmem:[%s3 + $0x10] sm:$0xff]
        %v520 = vld [vmem:[%s3 + $0x18] sm:$0xff]
        %v521 = vld [vmem:[%s3 + $0x20] sm:$0xff]
        %v522 = vld [vmem:[%s3 + $0x28] sm:$0xff]
        %v523 = vld [vmem:[%s3 + $0x30] sm:$0xff]
        %v524 = vld [vmem:[%s3 + $0x38] sm:$0xff]
        %v525 = vld [vmem:[%s3 + $0x40] sm:$0xff]
        %v526 = vld [vmem:[%s3 + $0x48] sm:$0xff]
        %v527 = vld [vmem:[%s3 + $0x50] sm:$0xff]
        %v528 = vld [vmem:[%s3 + $0x58] sm:$0xff]
        %v529 = vld [vmem:[%s3 + $0x60] sm:$0xff]
        %v530 = vld [vmem:[%s3 + $0x68] sm:$0xff]
        %v531 = vld [vmem:[%s3 + $0x70] sm:$0xff]
        %v532 = vld [vmem:[%s3 + $0x78] sm:$0xff]
        %v533 = vld [vmem:[%s4] sm:$0x1]
        %v535 = vlaneseq
        %v536 = vshrl.u32 %v535, 7
        %v537 = vsub.s32 0, %v536
        %v538 = vrot.slane %v533, %v537
        %540 = vmatprep.subr.mxu0 0.0
        %541 = vmatpush1.msra.mxu0 %v517
        %542 = vmatprep.subr.mxu0 0.0
        %543 = vmatpush1.msra.mxu0 %v518
        %544 = vmatprep.subr.mxu0 0.0
        %545 = vmatpush1.msra.mxu0 %v519
        %546 = vmatprep.subr.mxu0 0.0
        %547 = vmatpush1.msra.mxu0 %v520
        %548 = vmatprep.subr.mxu0 0.0
        %549 = vmatpush1.msra.mxu0 %v521
        %550 = vmatprep.subr.mxu0 0.0
        %551 = vmatpush1.msra.mxu0 %v522
        %552 = vmatprep.subr.mxu0 0.0
        %553 = vmatpush1.msra.mxu0 %v523
        %554 = vmatprep.subr.mxu0 0.0
        %555 = vmatpush1.msra.mxu0 %v524
        %556 = vmatprep.subr.mxu0 0.0
        %557 = vmatpush1.msra.mxu0 %v525
        %558 = vmatprep.subr.mxu0 0.0
        %559 = vmatpush1.msra.mxu0 %v526
        %560 = vmatprep.subr.mxu0 0.0
        %561 = vmatpush1.msra.mxu0 %v527
        %562 = vmatprep.subr.mxu0 0.0
        %563 = vmatpush1.msra.mxu0 %v528
        %564 = vmatprep.subr.mxu0 0.0
        %565 = vmatpush1.msra.mxu0 %v529
        %566 = vmatprep.subr.mxu0 0.0
        %567 = vmatpush1.msra.mxu0 %v530
        %568 = vmatprep.subr.mxu0 0.0
        %569 = vmatpush1.msra.mxu0 %v531
        %570 = vmatprep.subr.mxu0 0.0
        %571 = vmatpush1.msra.mxu0 %v532
        %572 = vmatprep.subr.mxu0 0.0
        %573 = vmatpush1.msra.mxu0 0.0
        %574 = vmatprep.subr.mxu0 0.0
        %575 = vmatpush1.msra.mxu0 0.0
        %576 = vmatprep.subr.mxu0 0.0
        %577 = vmatpush1.msra.mxu0 0.0
        %578 = vmatprep.subr.mxu0 0.0
        %579 = vmatpush1.msra.mxu0 0.0
        %580 = vmatprep.subr.mxu0 0.0
        %581 = vmatpush1.msra.mxu0 0.0
        %582 = vmatprep.subr.mxu0 0.0
        %583 = vmatpush1.msra.mxu0 0.0
        %584 = vmatprep.subr.mxu0 0.0
        %585 = vmatpush1.msra.mxu0 0.0
        %586 = vmatprep.subr.mxu0 0.0
        %587 = vmatpush1.msra.mxu0 0.0
        %588 = vmatprep.subr.mxu0 0.0
        %589 = vmatpush1.msra.mxu0 0.0
        %590 = vmatprep.subr.mxu0 0.0
        %591 = vmatpush1.msra.mxu0 0.0
        %592 = vmatprep.subr.mxu0 0.0
        %593 = vmatpush1.msra.mxu0 0.0
        %594 = vmatprep.subr.mxu0 0.0
        %595 = vmatpush1.msra.mxu0 0.0
        %596 = vmatprep.subr.mxu0 0.0
        %597 = vmatpush1.msra.mxu0 0.0
        %598 = vmatprep.subr.mxu0 0.0
        %599 = vmatpush1.msra.mxu0 0.0
        %600 = vmatprep.subr.mxu0 0.0
        %601 = vmatpush1.msra.mxu0 0.0
        %602 = vmatprep.subr.mxu0 0.0
        %603 = vmatpush1.msra.mxu0 0.0
        %604 = vmatprep.mubr.f32.mxu0 0.0
        %605 = vmatmul.mubr.f32.gmra.mrb[0].mxu0 %v501
        %v606 = vpop.f32.mrb[0].mxu0
        %v607 = vadd.f32 %v538, %v606
        %v608 = vpop.f32.mrb[0].mxu0
        %609 = vmatprep.mubr.f32.mxu0 0.0
        %610 = vmatmul.mubr.f32.gmra.mrb[0].mxu0 %v502
        %v611 = vpop.f32.mrb[0].mxu0
        %v612 = vadd.f32 %v538, %v611
        %v613 = vpop.f32.mrb[0].mxu0
        %614 = vmatprep.mubr.f32.mxu0 0.0
        %615 = vmatmul.mubr.f32.gmra.mrb[0].mxu0 %v503
        %v616 = vpop.f32.mrb[0].mxu0
        %v617 = vadd.f32 %v538, %v616
        %v618 = vpop.f32.mrb[0].mxu0
        %619 = vmatprep.mubr.f32.mxu0 0.0
        %620 = vmatmul.mubr.f32.gmra.mrb[0].mxu0 %v504
        %v621 = vpop.f32.mrb[0].mxu0
        %v622 = vadd.f32 %v538, %v621
        %v623 = vpop.f32.mrb[0].mxu0
        %624 = vmatprep.mubr.f32.mxu0 0.0
        %625 = vmatmul.mubr.f32.gmra.mrb[0].mxu0 %v505
        %v626 = vpop.f32.mrb[0].mxu0
        %v627 = vadd.f32 %v538, %v626
        %v628 = vpop.f32.mrb[0].mxu0
        %629 = vmatprep.mubr.f32.mxu0 0.0
        %630 = vmatmul.mubr.f32.gmra.mrb[0].mxu0 %v506
        %v631 = vpop.f32.mrb[0].mxu0
        %v632 = vadd.f32 %v538, %v631
        %v633 = vpop.f32.mrb[0].mxu0
        %634 = vmatprep.mubr.f32.mxu0 0.0
        %635 = vmatmul.mubr.f32.gmra.mrb[0].mxu0 %v507
        %v636 = vpop.f32.mrb[0].mxu0
        %v637 = vadd.f32 %v538, %v636
        %v638 = vpop.f32.mrb[0].mxu0
        %639 = vmatprep.mubr.f32.mxu0 0.0
        %640 = vmatmul.mubr.f32.gmra.mrb[0].mxu0 %v508
        %v641 = vpop.f32.mrb[0].mxu0
        %v642 = vadd.f32 %v538, %v641
        %v643 = vpop.f32.mrb[0].mxu0
        %644 = vmatprep.mubr.f32.mxu0 0.0
        %645 = vmatmul.mubr.f32.gmra.mrb[0].mxu0 %v509
        %v646 = vpop.f32.mrb[0].mxu0
        %v647 = vadd.f32 %v538, %v646
        %v648 = vpop.f32.mrb[0].mxu0
        %649 = vmatprep.mubr.f32.mxu0 0.0
        %650 = vmatmul.mubr.f32.gmra.mrb[0].mxu0 %v510
        %v651 = vpop.f32.mrb[0].mxu0
        %v652 = vadd.f32 %v538, %v651
        %v653 = vpop.f32.mrb[0].mxu0
        %654 = vmatprep.mubr.f32.mxu0 0.0
        %655 = vmatmul.mubr.f32.gmra.mrb[0].mxu0 %v511
        %v656 = vpop.f32.mrb[0].mxu0
        %v657 = vadd.f32 %v538, %v656
        %v658 = vpop.f32.mrb[0].mxu0
        %659 = vmatprep.mubr.f32.mxu0 0.0
        %660 = vmatmul.mubr.f32.gmra.mrb[0].mxu0 %v512
        %v661 = vpop.f32.mrb[0].mxu0
        %v662 = vadd.f32 %v538, %v661
        %v663 = vpop.f32.mrb[0].mxu0
        %664 = vmatprep.mubr.f32.mxu0 0.0
        %665 = vmatmul.mubr.f32.gmra.mrb[0].mxu0 %v513
        %v666 = vpop.f32.mrb[0].mxu0
        %v667 = vadd.f32 %v538, %v666
        %v668 = vpop.f32.mrb[0].mxu0
        %669 = vmatprep.mubr.f32.mxu0 0.0
        %670 = vmatmul.mubr.f32.gmra.mrb[0].mxu0 %v514
        %v671 = vpop.f32.mrb[0].mxu0
        %v672 = vadd.f32 %v538, %v671
        %v673 = vpop.f32.mrb[0].mxu0
        %674 = vmatprep.mubr.f32.mxu0 0.0
        %675 = vmatmul.mubr.f32.gmra.mrb[0].mxu0 %v515
        %v676 = vpop.f32.mrb[0].mxu0
        %v677 = vadd.f32 %v538, %v676
        %v678 = vpop.f32.mrb[0].mxu0
        %679 = vmatprep.mubr.f32.mxu0 0.0
        %680 = vmatmul.mubr.f32.gmra.mrb[0].mxu0 %v516
        %v681 = vpop.f32.mrb[0].mxu0
        %v682 = vadd.f32 %v538, %v681
        %v683 = vpop.f32.mrb[0].mxu0
        %684 = vdwg.mxu0
        %v685 = vmax.f32 %v607, 0.0
        %v686 = vmax.f32 %v612, 0.0
        %v687 = vmax.f32 %v617, 0.0
        %v688 = vmax.f32 %v622, 0.0
        %v689 = vmax.f32 %v627, 0.0
        %v690 = vmax.f32 %v632, 0.0
        %v691 = vmax.f32 %v637, 0.0
        %v692 = vmax.f32 %v642, 0.0
        %v693 = vmax.f32 %v647, 0.0
        %v694 = vmax.f32 %v652, 0.0
        %v695 = vmax.f32 %v657, 0.0
        %v696 = vmax.f32 %v662, 0.0
        %v697 = vmax.f32 %v667, 0.0
        %v698 = vmax.f32 %v672, 0.0
        %v699 = vmax.f32 %v677, 0.0
        %v700 = vmax.f32 %v682, 0.0
        %v701 = vld [vmem:[%s5] sm:$0xff]
        %v702 = vld [vmem:[%s5 + $0x8] sm:$0xff]
        %v703 = vld [vmem:[%s5 + $0x10] sm:$0xff]
        %v704 = vld [vmem:[%s5 + $0x18] sm:$0xff]
        %v705 = vld [vmem:[%s5 + $0x20] sm:$0xff]
        %v706 = vld [vmem:[%s5 + $0x28] sm:$0xff]
        %v707 = vld [vmem:[%s5 + $0x30] sm:$0xff]
        %v708 = vld [vmem:[%s5 + $0x38] sm:$0xff]
        %v709 = vld [vmem:[%s5 + $0x40] sm:$0xff]
        %v710 = vld [vmem:[%s5 + $0x48] sm:$0xff]
        %v711 = vld [vmem:[%s5 + $0x50] sm:$0xff]
        %v712 = vld [vmem:[%s5 + $0x58] sm:$0xff]
        %v713 = vld [vmem:[%s5 + $0x60] sm:$0xff]
        %v714 = vld [vmem:[%s5 + $0x68] sm:$0xff]
        %v715 = vld [vmem:[%s5 + $0x70] sm:$0xff]
        %v716 = vld [vmem:[%s5 + $0x78] sm:$0xff]
        %v717 = vld [vmem:[%s6] sm:$0x1]
        %v719 = vlaneseq
        %v720 = vshrl.u32 %v719, 7
        %v721 = vsub.s32 0, %v720
        %v722 = vrot.slane %v717, %v721
        %724 = vmatprep.subr.mxu0 0.0
        %725 = vmatpush1.msra.mxu0 %v701
        %726 = vmatprep.subr.mxu0 0.0
        %727 = vmatpush1.msra.mxu0 %v702
        %728 = vmatprep.subr.mxu0 0.0
        %729 = vmatpush1.msra.mxu0 %v703
        %730 = vmatprep.subr.mxu0 0.0
        %731 = vmatpush1.msra.mxu0 %v704
        %732 = vmatprep.subr.mxu0 0.0
        %733 = vmatpush1.msra.mxu0 %v705
        %734 = vmatprep.subr.mxu0 0.0
        %735 = vmatpush1.msra.mxu0 %v706
        %736 = vmatprep.subr.mxu0 0.0
        %737 = vmatpush1.msra.mxu0 %v707
        %738 = vmatprep.subr.mxu0 0.0
        %739 = vmatpush1.msra.mxu0 %v708
        %740 = vmatprep.subr.mxu0 0.0
        %741 = vmatpush1.msra.mxu0 %v709
        %742 = vmatprep.subr.mxu0 0.0
        %743 = vmatpush1.msra.mxu0 %v710
        %744 = vmatprep.subr.mxu0 0.0
        %745 = vmatpush1.msra.mxu0 %v711
        %746 = vmatprep.subr.mxu0 0.0
        %747 = vmatpush1.msra.mxu0 %v712
        %748 = vmatprep.subr.mxu0 0.0
        %749 = vmatpush1.msra.mxu0 %v713
        %750 = vmatprep.subr.mxu0 0.0
        %751 = vmatpush1.msra.mxu0 %v714
        %752 = vmatprep.subr.mxu0 0.0
        %753 = vmatpush1.msra.mxu0 %v715
        %754 = vmatprep.subr.mxu0 0.0
        %755 = vmatpush1.msra.mxu0 %v716
        %756 = vmatprep.subr.mxu0 0.0
        %757 = vmatpush1.msra.mxu0 0.0
        %758 = vmatprep.subr.mxu0 0.0
        %759 = vmatpush1.msra.mxu0 0.0
        %760 = vmatprep.subr.mxu0 0.0
        %761 = vmatpush1.msra.mxu0 0.0
        %762 = vmatprep.subr.mxu0 0.0
        %763 = vmatpush1.msra.mxu0 0.0
        %764 = vmatprep.subr.mxu0 0.0
        %765 = vmatpush1.msra.mxu0 0.0
        %766 = vmatprep.subr.mxu0 0.0
        %767 = vmatpush1.msra.mxu0 0.0
        %768 = vmatprep.subr.mxu0 0.0
        %769 = vmatpush1.msra.mxu0 0.0
        %770 = vmatprep.subr.mxu0 0.0
        %771 = vmatpush1.msra.mxu0 0.0
        %772 = vmatprep.subr.mxu0 0.0
        %773 = vmatpush1.msra.mxu0 0.0
        %774 = vmatprep.subr.mxu0 0.0
        %775 = vmatpush1.msra.mxu0 0.0
        %776 = vmatprep.subr.mxu0 0.0
        %777 = vmatpush1.msra.mxu0 0.0
        %778 = vmatprep.subr.mxu0 0.0
        %779 = vmatpush1.msra.mxu0 0.0
        %780 = vmatprep.subr.mxu0 0.0
        %781 = vmatpush1.msra.mxu0 0.0
        %782 = vmatprep.subr.mxu0 0.0
        %783 = vmatpush1.msra.mxu0 0.0
        %784 = vmatprep.subr.mxu0 0.0
        %785 = vmatpush1.msra.mxu0 0.0
        %786 = vmatprep.subr.mxu0 0.0
        %787 = vmatpush1.msra.mxu0 0.0
        %788 = vmatprep.mubr.f32.mxu0 0.0
        %789 = vmatmul.mubr.f32.gmra.mrb[0].mxu0 %v685
        %v790 = vpop.f32.mrb[0].mxu0
        %v791 = vadd.f32 %v722, %v790
        %v792 = vpop.f32.mrb[0].mxu0
        %793 = vmatprep.mubr.f32.mxu0 0.0
        %794 = vmatmul.mubr.f32.gmra.mrb[0].mxu0 %v686
        %v795 = vpop.f32.mrb[0].mxu0
        %v796 = vadd.f32 %v722, %v795
        %v797 = vpop.f32.mrb[0].mxu0
        %798 = vmatprep.mubr.f32.mxu0 0.0
        %799 = vmatmul.mubr.f32.gmra.mrb[0].mxu0 %v687
        %v800 = vpop.f32.mrb[0].mxu0
        %v801 = vadd.f32 %v722, %v800
        %v802 = vpop.f32.mrb[0].mxu0
        %803 = vmatprep.mubr.f32.mxu0 0.0
        %804 = vmatmul.mubr.f32.gmra.mrb[0].mxu0 %v688
        %v805 = vpop.f32.mrb[0].mxu0
        %v806 = vadd.f32 %v722, %v805
        %v807 = vpop.f32.mrb[0].mxu0
        %808 = vmatprep.mubr.f32.mxu0 0.0
        %809 = vmatmul.mubr.f32.gmra.mrb[0].mxu0 %v689
        %v810 = vpop.f32.mrb[0].mxu0
        %v811 = vadd.f32 %v722, %v810
        %v812 = vpop.f32.mrb[0].mxu0
        %813 = vmatprep.mubr.f32.mxu0 0.0
        %814 = vmatmul.mubr.f32.gmra.mrb[0].mxu0 %v690
        %v815 = vpop.f32.mrb[0].mxu0
        %v816 = vadd.f32 %v722, %v815
        %v817 = vpop.f32.mrb[0].mxu0
        %818 = vmatprep.mubr.f32.mxu0 0.0
        %819 = vmatmul.mubr.f32.gmra.mrb[0].mxu0 %v691
        %v820 = vpop.f32.mrb[0].mxu0
        %v821 = vadd.f32 %v722, %v820
        %v822 = vpop.f32.mrb[0].mxu0
        %823 = vmatprep.mubr.f32.mxu0 0.0
        %824 = vmatmul.mubr.f32.gmra.mrb[0].mxu0 %v692
        %v825 = vpop.f32.mrb[0].mxu0
        %v826 = vadd.f32 %v722, %v825
        %v827 = vpop.f32.mrb[0].mxu0
        %828 = vmatprep.mubr.f32.mxu0 0.0
        %829 = vmatmul.mubr.f32.gmra.mrb[0].mxu0 %v693
        %v830 = vpop.f32.mrb[0].mxu0
        %v831 = vadd.f32 %v722, %v830
        %v832 = vpop.f32.mrb[0].mxu0
        %833 = vmatprep.mubr.f32.mxu0 0.0
        %834 = vmatmul.mubr.f32.gmra.mrb[0].mxu0 %v694
        %v835 = vpop.f32.mrb[0].mxu0
        %v836 = vadd.f32 %v722, %v835
        %v837 = vpop.f32.mrb[0].mxu0
        %838 = vmatprep.mubr.f32.mxu0 0.0
        %839 = vmatmul.mubr.f32.gmra.mrb[0].mxu0 %v695
        %v840 = vpop.f32.mrb[0].mxu0
        %v841 = vadd.f32 %v722, %v840
        %v842 = vpop.f32.mrb[0].mxu0
        %843 = vmatprep.mubr.f32.mxu0 0.0
        %844 = vmatmul.mubr.f32.gmra.mrb[0].mxu0 %v696
        %v845 = vpop.f32.mrb[0].mxu0
        %v846 = vadd.f32 %v722, %v845
        %v847 = vpop.f32.mrb[0].mxu0
        %848 = vmatprep.mubr.f32.mxu0 0.0
        %849 = vmatmul.mubr.f32.gmra.mrb[0].mxu0 %v697
        %v850 = vpop.f32.mrb[0].mxu0
        %v851 = vadd.f32 %v722, %v850
        %v852 = vpop.f32.mrb[0].mxu0
        %853 = vmatprep.mubr.f32.mxu0 0.0
        %854 = vmatmul.mubr.f32.gmra.mrb[0].mxu0 %v698
        %v855 = vpop.f32.mrb[0].mxu0
        %v856 = vadd.f32 %v722, %v855
        %v857 = vpop.f32.mrb[0].mxu0
        %858 = vmatprep.mubr.f32.mxu0 0.0
        %859 = vmatmul.mubr.f32.gmra.mrb[0].mxu0 %v699
        %v860 = vpop.f32.mrb[0].mxu0
        %v861 = vadd.f32 %v722, %v860
        %v862 = vpop.f32.mrb[0].mxu0
        %863 = vmatprep.mubr.f32.mxu0 0.0
        %864 = vmatmul.mubr.f32.gmra.mrb[0].mxu0 %v700
        %v865 = vpop.f32.mrb[0].mxu0
        %v866 = vadd.f32 %v722, %v865
        %v867 = vpop.f32.mrb[0].mxu0
        %868 = vdwg.mxu0
        %869 = vst [vmem:[%s272] sm:$0xff] %v791
        %870 = vst [vmem:[%s272 + $0x8] sm:$0xff] %v796
        %871 = vst [vmem:[%s272 + $0x10] sm:$0xff] %v801
        %872 = vst [vmem:[%s272 + $0x18] sm:$0xff] %v806
        %873 = vst [vmem:[%s272 + $0x20] sm:$0xff] %v811
        %874 = vst [vmem:[%s272 + $0x28] sm:$0xff] %v816
        %875 = vst [vmem:[%s272 + $0x30] sm:$0xff] %v821
        %876 = vst [vmem:[%s272 + $0x38] sm:$0xff] %v826
        %877 = vst [vmem:[%s272 + $0x40] sm:$0xff] %v831
        %878 = vst [vmem:[%s272 + $0x48] sm:$0xff] %v836
        %879 = vst [vmem:[%s272 + $0x50] sm:$0xff] %v841
        %880 = vst [vmem:[%s272 + $0x58] sm:$0xff] %v846
        %881 = vst [vmem:[%s272 + $0x60] sm:$0xff] %v851
        %882 = vst [vmem:[%s272 + $0x68] sm:$0xff] %v856
        %883 = vst [vmem:[%s272 + $0x70] sm:$0xff] %v861
        %884 = vst [vmem:[%s272 + $0x78] sm:$0xff] %v866
        %s885 = sand.u32 %s181, 1
        %s886 = scalar_lea.sflag [#allocation3], %s885
        %s887 = sand.u32 %s181, 1
        %s888 = smul.addr %s887, 128
        %s889 = scalar_lea.vmem [#allocation2], %s888
        // Predicated region
        $region49: #{tpu_custom_call.1} parent=47 // pred_check
          %p890 = pneg %p191
        $region50: #{tpu_custom_call.1} parent=47 // pred_check_branch
          %892 = sbr.rel (%p890) target = $region52
        $region51: #{tpu_custom_call.1} parent=47 // pred_region
          %s893 = smul.u32 16, %s21
          %s895 = ssub.s32 2048, 2048
          %896 = vsyncadd %s886, %s895
          %s897 = smul.addr %s893, 128
          %s898 = scalar_lea.hbm %s7, %s897
          %s899 = sshll.u32 %s889, 4
          %s900 = int_to_ptr.vmem [resolvable:$true] %s899
          %905 = dma.vmem_to_hbm [thread:$0]  %s900, 2048, %s898, %s886, 128, 128, 8
        $region52: #{tpu_custom_call.1} parent=47 // pred_fallthru
          _
      $region48: #{tpu_custom_call.1} parent=5 // pred_fallthru
        _
      %p906 = scmp.le.s32.totalorder 2, %s16
      // Predicated region
      $region53: #{tpu_custom_call.1} parent=5 // pred_check
        %p907 = pneg %p906
      $region54: #{tpu_custom_call.1} parent=5 // pred_check_branch
        %909 = sbr.rel (%p907) target = $region56
      $region55: #{tpu_custom_call.1} parent=5 // pred_region
        %s910 = ssub.s32 %s16, 2
        // Predicated region
        $region57: #{tpu_custom_call.1} parent=55 // pred_check
          %p911 = pneg %p197
        $region58: #{tpu_custom_call.1} parent=55 // pred_check_branch
          %913 = sbr.rel (%p911) target = $region60
        $region59: #{tpu_custom_call.1} parent=55 // pred_region
          %s914 = sand.u32 %s182, 1
          %s915 = scalar_lea.sflag [#allocation3], %s914
          %s916 = sand.u32 %s182, 1
          %s917 = smul.addr %s916, 128
          %s918 = scalar_lea.vmem [#allocation2], %s917
          %919 = dma.done %s915, 2048
        $region60: #{tpu_custom_call.1} parent=55 // pred_fallthru
          _
      $region56: #{tpu_custom_call.1} parent=5 // pred_fallthru
        _
    $region6: #{tpu_custom_call.1} parent=1 // loop_footer
      %s20 = sadd.s32 1, %s16
    $region7: #{tpu_custom_call.1} parent=1 // loop_footer_branch
      %15 = sbr.rel target = $region3
    $region8: #{tpu_custom_call.1} parent=1 // loop_exit
      _
    %920 = vsyncpa [#allocation3], 1
    %s921 = scalar_lea.sflag [#allocation3], 1
    %922 = vsyncpa %s921, 1

</llo_original>
